<compile_context>
chip_gen: v6e
topology: v6e:2x2x1
jax: 0.10.0
libtpu: 0.0.40
codegen_flags: <defaults>
</compile_context>

<pallas_src>
import jax
import jax.numpy as jnp
from jax.experimental import pallas as pl
from jax.experimental.pallas import tpu as pltpu


def _round_up(x, m):
    return (x + m - 1) // m * m


def _semalign_kernel(x_ref, w1_ref, b1_ref, w2_ref, b2_ref, out_ref):
    # Layer 1: (tile_b, K) @ (K, H) on the MXU, f32 accumulation.
    h = jnp.dot(x_ref[...], w1_ref[...], preferred_element_type=jnp.float32)
    h = h + b1_ref[...]                      # b1 is (1, H) -> broadcast over batch
    h = jnp.where(h >= 0, h, 0.2 * h)        # LeakyReLU(negative_slope=0.2)
    # Dropout(p=0.0) is the identity.
    # Layer 2: cast intermediate to bf16 for the MXU, accumulate in f32.
    out = jnp.dot(h.astype(w2_ref.dtype), w2_ref[...],
                  preferred_element_type=jnp.float32)
    out = out + b2_ref[...]
    out_ref[...] = out.astype(out_ref.dtype)


def semalign_forward(semantic, contexts, w1, b1, w2, b2, *, tile_b=128,
                     compute_dtype=jnp.bfloat16):
    """semantic: (B, v), contexts: (B, s)
       w1: (v+s, h), b1: (h,), w2: (h, v), b2: (v,)  (transposed vs torch)."""
    B, v = semantic.shape
    _, s = contexts.shape
    K = v + s
    H = w1.shape[1]
    assert w1.shape == (K, H) and w2.shape == (H, v)

    # ---- layout plumbing: lane-dense feature dims (multiples of 128),
    # ---- sublane-aligned batch tiles.  Zero padding contributes exactly 0.
    K_p = _round_up(K, 128)
    H_p = _round_up(H, 128)
    V_p = _round_up(v, 128)
    B_p = _round_up(B, tile_b)

    # Fuse the concat in the wrapper (one small copy) instead of splitting W1.
    x = jnp.concatenate([semantic, contexts], axis=-1).astype(compute_dtype)
    x = jnp.pad(x, ((0, B_p - B), (0, K_p - K)))

    w1_p = jnp.pad(w1.astype(compute_dtype), ((0, K_p - K), (0, H_p - H)))
    w2_p = jnp.pad(w2.astype(compute_dtype), ((0, H_p - H), (0, V_p - v)))
    b1_p = jnp.pad(b1.astype(jnp.float32), (0, H_p - H)).reshape(1, H_p)
    b2_p = jnp.pad(b2.astype(jnp.float32), (0, V_p - v)).reshape(1, V_p)

    grid = (B_p // tile_b,)

    # VMEM budget: double-buffered activation/output tiles + resident weights
    # (+16 MiB headroom), clamped to 48 MiB (leaves headroom on v7x's 64 MiB).
    bpe = jnp.dtype(compute_dtype).itemsize
    vmem_needed = (2 * tile_b * K_p * bpe                 # x tile (double-buffered)
                   + 2 * tile_b * V_p * 4                 # out tile
                   + 2 * (K_p * H_p + H_p * V_p) * bpe    # weights (resident)
                   + 2 * (H_p + V_p) * 4                  # biases
                   + tile_b * H_p * 4)                    # intermediate h
    vmem_limit = min(max(vmem_needed + (16 << 20), 32 << 20), 48 << 20)

    out_p = pl.pallas_call(
        _semalign_kernel,
        out_shape=jax.ShapeDtypeStruct((B_p, V_p), semantic.dtype),
        grid=grid,
        in_specs=[
            pl.BlockSpec((tile_b, K_p), lambda i: (i, 0)),   # activations: batch-tiled
            pl.BlockSpec((K_p, H_p),    lambda i: (0, 0)),   # W1: VMEM-resident
            pl.BlockSpec((1, H_p),      lambda i: (0, 0)),   # b1
            pl.BlockSpec((H_p, V_p),    lambda i: (0, 0)),   # W2: VMEM-resident
            pl.BlockSpec((1, V_p),      lambda i: (0, 0)),   # b2
        ],
        out_specs=pl.BlockSpec((tile_b, V_p), lambda i: (i, 0)),
        compiler_params=pltpu.CompilerParams(
            dimension_semantics=("parallel",),
            vmem_limit_bytes=int(vmem_limit),
        ),
    )(x, w1_p, b1_p, w2_p, b2_p)

    return out_p[:B, :v]


def _reference_f32(semantic, contexts, w1, b1, w2, b2):
    x = jnp.concatenate([semantic, contexts], axis=-1)
    f = x @ w1 + b1
    f = jnp.where(f >= 0, f, 0.2 * f)
    return f @ w2 + b2


if __name__ == "__main__":
    # Small shapes consistent with the module (TPU tile friendly; h shrunk
    # from the original 2048 for the demo).  B=256 exercises the batch grid.
    B = 256
    V_SIZE = 128   # v_size
    S_SIZE = 128   # s_size
    H_SIZE = 256   # h_size

    key = jax.random.PRNGKey(0)
    k_sem, k_ctx, k_w1, k_b1, k_w2, k_b2 = jax.random.split(key, 6)

    semantic = jax.random.normal(k_sem, (B, V_SIZE), dtype=jnp.float32)
    contexts = jax.random.normal(k_ctx, (B, S_SIZE), dtype=jnp.float32)

    # Deterministic synthetic params; stored as (in, out), transposed vs torch.
    w1 = jax.random.normal(k_w1, (V_SIZE + S_SIZE, H_SIZE), jnp.float32) * 0.02
    b1 = jax.random.normal(k_b1, (H_SIZE,), jnp.float32) * 0.02
    w2 = jax.random.normal(k_w2, (H_SIZE, V_SIZE), jnp.float32) * 0.02
    b2 = jax.random.normal(k_b2, (V_SIZE,), jnp.float32) * 0.02

    out = semalign_forward(semantic, contexts, w1, b1, w2, b2)
    out = jax.block_until_ready(out)

    ref = _reference_f32(semantic, contexts, w1, b1, w2, b2)
    assert out.shape == (B, V_SIZE)
    # bf16 compute (f32 accumulation) vs f32 reference: loosened tolerance.
    assert jnp.allclose(out, ref, atol=1e-2, rtol=1e-2), "mismatch vs reference"

    print("KERNEL_OK")
</pallas_src>

<mosaic_0001>
module attributes {stable_mosaic.version = 11 : i64} {
  func.func @_semalign_kernel(%arg0: i32, %arg1: memref<128x256xbf16, #tpu.memory_space<vmem>>, %arg2: memref<256x256xbf16, #tpu.memory_space<vmem>>, %arg3: memref<1x256xf32, #tpu.memory_space<vmem>>, %arg4: memref<256x128xbf16, #tpu.memory_space<vmem>>, %arg5: memref<1x128xf32, #tpu.memory_space<vmem>>, %arg6: memref<128x128xf32, #tpu.memory_space<vmem>>) attributes {dimension_semantics = [#tpu.dimension_semantics<parallel>], iteration_bounds = array<i64: 2>, scalar_prefetch = 0 : i64, scratch_operands = 0 : i64, tpu.core_type = #tpu.core_type<tc>, window_params = [{transform_indices = @transform_0, window_bounds = array<i64: 128, 256>}, {pipeline_mode = #tpu.pipeline_mode<synchronous>, transform_indices = @transform_1, window_bounds = array<i64: 256, 256>}, {pipeline_mode = #tpu.pipeline_mode<synchronous>, transform_indices = @transform_2, window_bounds = array<i64: 1, 256>}, {pipeline_mode = #tpu.pipeline_mode<synchronous>, transform_indices = @transform_3, window_bounds = array<i64: 256, 128>}, {pipeline_mode = #tpu.pipeline_mode<synchronous>, transform_indices = @transform_4, window_bounds = array<i64: 1, 128>}, {transform_indices = @transform_5, window_bounds = array<i64: 128, 128>}]} {
    %c0 = arith.constant 0 : index
    %c0_0 = arith.constant 0 : index
    %0 = vector.load %arg1[%c0, %c0_0] : memref<128x256xbf16, #tpu.memory_space<vmem>>, vector<128x256xbf16>
    %c0_1 = arith.constant 0 : index
    %c0_2 = arith.constant 0 : index
    %1 = vector.load %arg2[%c0_1, %c0_2] : memref<256x256xbf16, #tpu.memory_space<vmem>>, vector<256x256xbf16>
    %cst = arith.constant dense<0.000000e+00> : vector<128x256xf32>
    %2 = tpu.matmul %0, %1, %cst {dimension_numbers = #tpu.dot_dimension_numbers<[1], [0], [0], [1], [0, 0, 1, 1], [], []>} : vector<128x256xbf16>, vector<256x256xbf16>, vector<128x256xf32> -> vector<128x256xf32>
    %c0_3 = arith.constant 0 : index
    %c0_4 = arith.constant 0 : index
    %3 = vector.load %arg3[%c0_3, %c0_4] : memref<1x256xf32, #tpu.memory_space<vmem>>, vector<1x256xf32>
    %4 = vector.broadcast %3 : vector<1x256xf32> to vector<128x256xf32>
    %5 = arith.addf %2, %4 : vector<128x256xf32>
    %cst_5 = arith.constant 0.000000e+00 : f32
    %6 = vector.broadcast %cst_5 : f32 to vector<128x256xf32>
    %7 = arith.cmpf oge, %5, %6 : vector<128x256xf32>
    %cst_6 = arith.constant 2.000000e-01 : f32
    %8 = vector.broadcast %cst_6 : f32 to vector<128x256xf32>
    %9 = arith.mulf %8, %5 : vector<128x256xf32>
    %10 = arith.select %7, %5, %9 : vector<128x256xi1>, vector<128x256xf32>
    %11 = arith.truncf %10 : vector<128x256xf32> to vector<128x256xbf16>
    %c0_7 = arith.constant 0 : index
    %c0_8 = arith.constant 0 : index
    %12 = vector.load %arg4[%c0_7, %c0_8] : memref<256x128xbf16, #tpu.memory_space<vmem>>, vector<256x128xbf16>
    %cst_9 = arith.constant dense<0.000000e+00> : vector<128x128xf32>
    %13 = tpu.matmul %11, %12, %cst_9 {dimension_numbers = #tpu.dot_dimension_numbers<[1], [0], [0], [1], [0, 0, 1, 1], [], []>} : vector<128x256xbf16>, vector<256x128xbf16>, vector<128x128xf32> -> vector<128x128xf32>
    %c0_10 = arith.constant 0 : index
    %c0_11 = arith.constant 0 : index
    %14 = vector.load %arg5[%c0_10, %c0_11] : memref<1x128xf32, #tpu.memory_space<vmem>>, vector<1x128xf32>
    %15 = vector.broadcast %14 : vector<1x128xf32> to vector<128x128xf32>
    %16 = arith.addf %13, %15 : vector<128x128xf32>
    %c0_12 = arith.constant 0 : index
    %c0_13 = arith.constant 0 : index
    %17 = vector.load %arg6[%c0_12, %c0_13] : memref<128x128xf32, #tpu.memory_space<vmem>>, vector<128x128xf32>
    tpu.vector_store %arg6[%c0_12, %c0_13], %16 {strides = array<i32>} : memref<128x128xf32, #tpu.memory_space<vmem>>, vector<128x128xf32>,
    return
  }
  func.func @transform_0(%arg0: i32) -> (i32, i32) {
    %c0_i32 = arith.constant 0 : i32
    %c0_i32_0 = arith.constant 0 : i32
    return %arg0, %c0_i32 : i32, i32
  }
  func.func @transform_1(%arg0: i32) -> (i32, i32) {
    %c0_i32 = arith.constant 0 : i32
    %c0_i32_0 = arith.constant 0 : i32
    %c0_i32_1 = arith.constant 0 : i32
    return %c0_i32, %c0_i32_0 : i32, i32
  }
  func.func @transform_2(%arg0: i32) -> (i32, i32) {
    %c0_i32 = arith.constant 0 : i32
    %c0_i32_0 = arith.constant 0 : i32
    %c0_i32_1 = arith.constant 0 : i32
    return %c0_i32, %c0_i32_0 : i32, i32
  }
  func.func @transform_3(%arg0: i32) -> (i32, i32) {
    %c0_i32 = arith.constant 0 : i32
    %c0_i32_0 = arith.constant 0 : i32
    %c0_i32_1 = arith.constant 0 : i32
    return %c0_i32, %c0_i32_0 : i32, i32
  }
  func.func @transform_4(%arg0: i32) -> (i32, i32) {
    %c0_i32 = arith.constant 0 : i32
    %c0_i32_0 = arith.constant 0 : i32
    %c0_i32_1 = arith.constant 0 : i32
    return %c0_i32, %c0_i32_0 : i32, i32
  }
  func.func @transform_5(%arg0: i32) -> (i32, i32) {
    %c0_i32 = arith.constant 0 : i32
    %c0_i32_0 = arith.constant 0 : i32
    return %arg0, %c0_i32 : i32, i32
  }
}

</mosaic_0001>

<llo_original>
// kernel: tpu_custom_call.1
$region0: #{tpu_custom_call.1}
  #allocation0 [shape = 'u32[]', space=smem, size = 0x4, offset = 0x4, fixed_abs, tag = 'smem constant byte address 0x4 - core index']
  #allocation1 [shape = 'u32[144,128]{1,0:T(1,128)}', space=vmem, size = 0x12000, scoped, tag = 'internal scratch']
  %s0 = inlined_call_operand.hbm [shape: bf16[256,256], index: 0, kind: input, shape index: {}]
  %s1 = inlined_call_operand.hbm [shape: bf16[256,256], index: 1, kind: input, shape index: {}]
  %s2 = inlined_call_operand.vmem [shape: f32[1,256], index: 2, kind: input, shape index: {}]
  %s3 = inlined_call_operand.hbm [shape: bf16[256,128], index: 3, kind: input, shape index: {}]
  %s4 = inlined_call_operand.vmem [shape: f32[1,128], index: 4, kind: input, shape index: {}]
  %s5 = inlined_call_operand.hbm [shape: f32[256,128], index: 5, kind: output, shape index: {}]
  %s6 = sld [smem:[#allocation0]]
  $region65: #{tpu_custom_call.1} parent=0
    _
  %s8 = ssub.s32 1, %s6
  %s9 = scalar_select 0, %s8, %s6
  $region1: #{tpu_custom_call.1} parent=0
    #allocation2 [shape = 'u8[131072]{0}', space=vmem, size = 0x20000, scoped, tag = 'input window, operand 0']
    #allocation3 [shape = 's32[2]{0}', space=sflag, size = 0x8, scoped, tag = 'scoped memory for tpu_custom_call.1']
    #allocation4 [shape = 's32[2]{0}', space=sflag, size = 0x8, scoped, tag = 'scoped memory for tpu_custom_call.1']
    #allocation5 [shape = 'u8[131072]{0}', space=vmem, size = 0x20000, scoped, tag = 'input window, operand 1, single buffered']
    #allocation6 [shape = 's32[1]{0}', space=sflag, size = 0x4, scoped, tag = 'scoped memory for tpu_custom_call.1']
    #allocation7 [shape = 'u8[65536]{0}', space=vmem, size = 0x10000, scoped, tag = 'input window, operand 3, single buffered']
    #allocation8 [shape = 'u8[131072]{0}', space=vmem, size = 0x20000, scoped, tag = 'output window, operand 0']
    %10 = vsyncpa [#allocation3], 0
    %s11 = scalar_lea.sflag [#allocation3], 1
    %12 = vsyncpa %s11, 0
    %13 = vsyncpa [#allocation6], 0
    %14 = vsyncpa [#allocation4], 0
    %s15 = scalar_lea.sflag [#allocation4], 1
    %16 = vsyncpa %s15, 0
    loop: start=0, step=1, limit=4
    $region2: #{tpu_custom_call.1} parent=1 // loop_pre_header
      _
    $region3: #{tpu_custom_call.1} parent=1 // loop_header
      %s18 = sphi 0, %s22
      %p19 = scmp.ge.s32.totalorder %s18, 4
      %s28 = sphi 0, %s30
      %s31 = sphi 0, %s28
      %s32 = sphi 0, %s31
      %s48 = sphi 0, %s32
      %s52 = sphi 0, %s52
      %s54 = sphi 0, %s52
      %s55 = sphi 0, %s54
      %s69 = sphi 0, %s55
      %s73 = sphi 0, %s73
      %s75 = sphi 0, %s73
      %s76 = sphi 0, %s75
      %s90 = sphi 0, %s76
      %s94 = sphi 0, %s94
      %s96 = sphi 0, %s94
      %s97 = sphi 0, %s96
      %s111 = sphi 0, %s97
      %s115 = sphi 0, %s115
      %s117 = sphi 0, %s115
      %s118 = sphi 0, %s117
      %s132 = sphi 0, %s118
      %s138 = sphi 0, %s140
      %s141 = sphi 0, %s138
      %s142 = sphi 0, %s141
      %s158 = sphi 0, %s142
    $region4: #{tpu_custom_call.1} parent=1 // loop_header_branch
      %21 = sbr.rel (%p19) target = $region8
    $region5: #{tpu_custom_call.1} parent=1 // loop_body
      %s23 = ssub.s32 %s18, 1
      %s24 = ssub.s32 %s18, 2
      %s25 = sadd.s32 %s18, 1
      %s26 = ssub.s32 %s18, %s25
      %p27 = scmp.eq.s32.totalorder %s26, 0
      %s29 = sadd.s32 %s28, 1
      %s30 = scalar_select %p27, %s28, %s29
      %p33 = pneg %p27
      %p34 = scmp.eq.s32.totalorder %s18, 1
      %p35 = por %p33, %p34
      %p36 = scmp.ne.s32.totalorder %s28, %s31
      %p37 = scmp.eq.s32.totalorder %s18, 0
      %p38 = por %p36, %p37
      %p39 = scmp.ne.s32.totalorder %s28, %s31
      %p40 = scmp.eq.s32.totalorder %s23, 1
      %p41 = por %p39, %p40
      %p42 = scmp.ne.s32.totalorder %s31, %s32
      %p43 = scmp.eq.s32.totalorder %s23, 0
      %p44 = por %p42, %p43
      %p45 = scmp.ne.s32.totalorder %s31, %s32
      %p46 = scmp.eq.s32.totalorder %s24, 1
      %p47 = por %p45, %p46
      %p49 = scmp.ne.s32.totalorder %s32, %s48
      %p50 = scmp.eq.s32.totalorder %s24, 0
      %p51 = por %p49, %p50
      %s53 = sadd.s32 %s52, 1
      %p56 = scmp.eq.s32.totalorder %s18, 1
      %p57 = scmp.ne.s32.totalorder %s52, %s54
      %p58 = scmp.eq.s32.totalorder %s18, 0
      %p59 = por %p57, %p58
      %p60 = scmp.ne.s32.totalorder %s52, %s54
      %p61 = scmp.eq.s32.totalorder %s23, 1
      %p62 = por %p60, %p61
      %p63 = scmp.ne.s32.totalorder %s54, %s55
      %p64 = scmp.eq.s32.totalorder %s23, 0
      %p65 = por %p63, %p64
      %p66 = scmp.ne.s32.totalorder %s54, %s55
      %p67 = scmp.eq.s32.totalorder %s24, 1
      %p68 = por %p66, %p67
      %p70 = scmp.ne.s32.totalorder %s55, %s69
      %p71 = scmp.eq.s32.totalorder %s24, 0
      %p72 = por %p70, %p71
      %s74 = sadd.s32 %s73, 1
      %p77 = scmp.eq.s32.totalorder %s18, 1
      %p78 = scmp.ne.s32.totalorder %s73, %s75
      %p79 = scmp.eq.s32.totalorder %s18, 0
      %p80 = por %p78, %p79
      %p81 = scmp.ne.s32.totalorder %s73, %s75
      %p82 = scmp.eq.s32.totalorder %s23, 1
      %p83 = por %p81, %p82
      %p84 = scmp.ne.s32.totalorder %s75, %s76
      %p85 = scmp.eq.s32.totalorder %s23, 0
      %p86 = por %p84, %p85
      %p87 = scmp.ne.s32.totalorder %s75, %s76
      %p88 = scmp.eq.s32.totalorder %s24, 1
      %p89 = por %p87, %p88
      %p91 = scmp.ne.s32.totalorder %s76, %s90
      %p92 = scmp.eq.s32.totalorder %s24, 0
      %p93 = por %p91, %p92
      %s95 = sadd.s32 %s94, 1
      %p98 = scmp.eq.s32.totalorder %s18, 1
      %p99 = scmp.ne.s32.totalorder %s94, %s96
      %p100 = scmp.eq.s32.totalorder %s18, 0
      %p101 = por %p99, %p100
      %p102 = scmp.ne.s32.totalorder %s94, %s96
      %p103 = scmp.eq.s32.totalorder %s23, 1
      %p104 = por %p102, %p103
      %p105 = scmp.ne.s32.totalorder %s96, %s97
      %p106 = scmp.eq.s32.totalorder %s23, 0
      %p107 = por %p105, %p106
      %p108 = scmp.ne.s32.totalorder %s96, %s97
      %p109 = scmp.eq.s32.totalorder %s24, 1
      %p110 = por %p108, %p109
      %p112 = scmp.ne.s32.totalorder %s97, %s111
      %p113 = scmp.eq.s32.totalorder %s24, 0
      %p114 = por %p112, %p113
      %s116 = sadd.s32 %s115, 1
      %p119 = scmp.eq.s32.totalorder %s18, 1
      %p120 = scmp.ne.s32.totalorder %s115, %s117
      %p121 = scmp.eq.s32.totalorder %s18, 0
      %p122 = por %p120, %p121
      %p123 = scmp.ne.s32.totalorder %s115, %s117
      %p124 = scmp.eq.s32.totalorder %s23, 1
      %p125 = por %p123, %p124
      %p126 = scmp.ne.s32.totalorder %s117, %s118
      %p127 = scmp.eq.s32.totalorder %s23, 0
      %p128 = por %p126, %p127
      %p129 = scmp.ne.s32.totalorder %s117, %s118
      %p130 = scmp.eq.s32.totalorder %s24, 1
      %p131 = por %p129, %p130
      %p133 = scmp.ne.s32.totalorder %s118, %s132
      %p134 = scmp.eq.s32.totalorder %s24, 0
      %p135 = por %p133, %p134
      %s136 = ssub.s32 %s18, %s25
      %p137 = scmp.eq.s32.totalorder %s136, 0
      %s139 = sadd.s32 %s138, 1
      %s140 = scalar_select %p137, %s138, %s139
      %p143 = pneg %p137
      %p144 = scmp.eq.s32.totalorder %s18, 1
      %p145 = por %p143, %p144
      %p146 = scmp.ne.s32.totalorder %s138, %s141
      %p147 = scmp.eq.s32.totalorder %s18, 0
      %p148 = por %p146, %p147
      %p149 = scmp.ne.s32.totalorder %s138, %s141
      %p150 = scmp.eq.s32.totalorder %s23, 1
      %p151 = por %p149, %p150
      %p152 = scmp.ne.s32.totalorder %s141, %s142
      %p153 = scmp.eq.s32.totalorder %s23, 0
      %p154 = por %p152, %p153
      %p155 = scmp.ne.s32.totalorder %s141, %s142
      %p156 = scmp.eq.s32.totalorder %s24, 1
      %p157 = por %p155, %p156
      %p159 = scmp.ne.s32.totalorder %s142, %s158
      %p160 = scmp.eq.s32.totalorder %s24, 0
      %p161 = por %p159, %p160
      %p162 = scmp.le.s32.totalorder 1, %s18
      %p163 = scmp.lt.s32.totalorder %s18, 3
      %p164 = pnand %p162, %p163
      %p165 = pneg %p164
      // Predicated region
      $region9: #{tpu_custom_call.1} parent=5 // pred_check
        _
      $region10: #{tpu_custom_call.1} parent=5 // pred_check_branch
        %167 = sbr.rel (%p164) target = $region12
      $region11: #{tpu_custom_call.1} parent=5 // pred_region
        %s168 = ssub.s32 %s18, 1
        // Predicated region
        $region13: #{tpu_custom_call.1} parent=11 // pred_check
          %p169 = pneg %p65
        $region14: #{tpu_custom_call.1} parent=11 // pred_check_branch
          %171 = sbr.rel (%p169) target = $region16
        $region15: #{tpu_custom_call.1} parent=11 // pred_region
          %s173 = ssub.s32 4096, 4096
          %174 = vsyncadd [#allocation6], %s173
          %s175 = sshll.u32 [#allocation5], 4
          %s176 = int_to_ptr.vmem [resolvable:$true] %s175
          %181 = dma.hbm_to_vmem [thread:$0]  %s1, 4096, %s176, [#allocation6], 128, 128, 8
        $region16: #{tpu_custom_call.1} parent=11 // pred_fallthru
          _
        // Predicated region
        $region17: #{tpu_custom_call.1} parent=11 // pred_check
          %p182 = pneg %p86
        $region18: #{tpu_custom_call.1} parent=11 // pred_check_branch
          %184 = sbr.rel (%p182) target = $region20
        $region19: #{tpu_custom_call.1} parent=11 // pred_region
          _
        $region20: #{tpu_custom_call.1} parent=11 // pred_fallthru
          _
        // Predicated region
        $region21: #{tpu_custom_call.1} parent=11 // pred_check
          %p185 = pneg %p107
        $region22: #{tpu_custom_call.1} parent=11 // pred_check_branch
          %187 = sbr.rel (%p185) target = $region24
        $region23: #{tpu_custom_call.1} parent=11 // pred_region
          %s189 = ssub.s32 2048, 2048
          %190 = vsyncadd [#allocation6], %s189
          %s191 = sshll.u32 [#allocation7], 4
          %s192 = int_to_ptr.vmem [resolvable:$true] %s191
          %197 = dma.hbm_to_vmem [thread:$0]  %s3, 2048, %s192, [#allocation6], 64, 64, 4
        $region24: #{tpu_custom_call.1} parent=11 // pred_fallthru
          _
        // Predicated region
        $region25: #{tpu_custom_call.1} parent=11 // pred_check
          %p198 = pneg %p128
        $region26: #{tpu_custom_call.1} parent=11 // pred_check_branch
          %200 = sbr.rel (%p198) target = $region28
        $region27: #{tpu_custom_call.1} parent=11 // pred_region
          _
        $region28: #{tpu_custom_call.1} parent=11 // pred_fallthru
          _
      $region12: #{tpu_custom_call.1} parent=5 // pred_fallthru
        _
      %p201 = scmp.lt.s32.totalorder %s18, 2
      // Predicated region
      $region29: #{tpu_custom_call.1} parent=5 // pred_check
        %p202 = pneg %p201
      $region30: #{tpu_custom_call.1} parent=5 // pred_check_branch
        %204 = sbr.rel (%p202) target = $region32
      $region31: #{tpu_custom_call.1} parent=5 // pred_region
        // Predicated region
        $region33: #{tpu_custom_call.1} parent=31 // pred_check
          %p205 = pneg %p38
        $region34: #{tpu_custom_call.1} parent=31 // pred_check_branch
          %207 = sbr.rel (%p205) target = $region36
        $region35: #{tpu_custom_call.1} parent=31 // pred_region
          %s208 = sand.u32 %s28, 1
          %s209 = scalar_lea.sflag [#allocation3], %s208
          %s210 = sand.u32 %s28, 1
          %s211 = smul.addr %s210, 128
          %s212 = scalar_lea.vmem [#allocation2], %s211
          %s213 = smul.u32 16, %s18
          %s215 = ssub.s32 2048, 2048
          %216 = vsyncadd %s209, %s215
          %s217 = smul.addr %s213, 2
          %s218 = smul.addr %s217, 64
          %s219 = scalar_lea.hbm %s0, %s218
          %s220 = sshll.u32 %s212, 4
          %s221 = int_to_ptr.vmem [resolvable:$true] %s220
          %226 = dma.hbm_to_vmem [thread:$0]  %s219, 2048, %s221, %s209, 128, 128, 8
        $region36: #{tpu_custom_call.1} parent=31 // pred_fallthru
          _
      $region32: #{tpu_custom_call.1} parent=5 // pred_fallthru
        _
      %p227 = scmp.le.s32.totalorder 1, %s18
      %p228 = scmp.lt.s32.totalorder %s18, 3
      %p229 = pnand %p227, %p228
      %p230 = pneg %p229
      // Predicated region
      $region37: #{tpu_custom_call.1} parent=5 // pred_check
        _
      $region38: #{tpu_custom_call.1} parent=5 // pred_check_branch
        %232 = sbr.rel (%p229) target = $region40
      $region39: #{tpu_custom_call.1} parent=5 // pred_region
        %s233 = ssub.s32 %s18, 1
        %s234 = sand.u32 %s31, 1
        %s235 = scalar_lea.sflag [#allocation3], %s234
        %s236 = sand.u32 %s31, 1
        %s237 = smul.addr %s236, 128
        %s238 = scalar_lea.vmem [#allocation2], %s237
        // Predicated region
        $region41: #{tpu_custom_call.1} parent=39 // pred_check
          %p239 = pneg %p44
        $region42: #{tpu_custom_call.1} parent=39 // pred_check_branch
          %241 = sbr.rel (%p239) target = $region44
        $region43: #{tpu_custom_call.1} parent=39 // pred_region
          %242 = dma.done %s235, 2048
        $region44: #{tpu_custom_call.1} parent=39 // pred_fallthru
          _
        // Predicated region
        $region45: #{tpu_custom_call.1} parent=39 // pred_check
          %p243 = pneg %p65
        $region46: #{tpu_custom_call.1} parent=39 // pred_check_branch
          %245 = sbr.rel (%p243) target = $region48
        $region47: #{tpu_custom_call.1} parent=39 // pred_region
          %246 = dma.done [#allocation6], 4096
        $region48: #{tpu_custom_call.1} parent=39 // pred_fallthru
          _
        // Predicated region
        $region49: #{tpu_custom_call.1} parent=39 // pred_check
          %p247 = pneg %p107
        $region50: #{tpu_custom_call.1} parent=39 // pred_check_branch
          %249 = sbr.rel (%p247) target = $region52
        $region51: #{tpu_custom_call.1} parent=39 // pred_region
          %250 = dma.done [#allocation6], 2048
        $region52: #{tpu_custom_call.1} parent=39 // pred_fallthru
          _
        %s251 = sand.u32 %s31, 1
        %s252 = scalar_lea.sflag [#allocation3], %s251
        %s253 = sand.u32 %s31, 1
        %s254 = smul.addr %s253, 128
        %s255 = scalar_lea.vmem [#allocation2], %s254
        %p256 = pneg %p44
        %p257 = pneg %p41
        %p258 = pneg %p65
        %p259 = pneg %p62
        %p260 = pneg %p86
        %p261 = pneg %p83
        %p262 = pneg %p107
        %p263 = pneg %p104
        %p264 = pneg %p128
        %p265 = pneg %p125
        %p266 = pneg %p154
        %p267 = pneg %p151
        %s268 = sand.u32 %s141, 1
        %s269 = scalar_lea.sflag [#allocation4], %s268
        %s270 = sand.u32 %s141, 1
        %s271 = smul.addr %s270, 128
        %s272 = scalar_lea.vmem [#allocation8], %s271
        %s273 = smul.u32 16, %s23
        %s274 = smul.u32 16, %s23
        %v276 = vld [vmem:[%s238] sm:$0xff]
        %v277 = vld [vmem:[%s238 + $0x8] sm:$0xff]
        %v278 = vld [vmem:[%s238 + $0x10] sm:$0xff]
        %v279 = vld [vmem:[%s238 + $0x18] sm:$0xff]
        %v280 = vld [vmem:[%s238 + $0x20] sm:$0xff]
        %v281 = vld [vmem:[%s238 + $0x28] sm:$0xff]
        %v282 = vld [vmem:[%s238 + $0x30] sm:$0xff]
        %v283 = vld [vmem:[%s238 + $0x38] sm:$0xff]
        %v284 = vld [vmem:[%s238 + $0x40] sm:$0xff]
        %v285 = vld [vmem:[%s238 + $0x48] sm:$0xff]
        %v286 = vld [vmem:[%s238 + $0x50] sm:$0xff]
        %v287 = vld [vmem:[%s238 + $0x58] sm:$0xff]
        %v288 = vld [vmem:[%s238 + $0x60] sm:$0xff]
        %v289 = vld [vmem:[%s238 + $0x68] sm:$0xff]
        %v290 = vld [vmem:[%s238 + $0x70] sm:$0xff]
        %v291 = vld [vmem:[%s238 + $0x78] sm:$0xff]
        %v292 = vld [vmem:[#allocation5] sm:$0xff]
        %v293 = vld [vmem:[#allocation5 + $0x8] sm:$0xff]
        %v294 = vld [vmem:[#allocation5 + $0x10] sm:$0xff]
        %v295 = vld [vmem:[#allocation5 + $0x18] sm:$0xff]
        %v296 = vld [vmem:[#allocation5 + $0x20] sm:$0xff]
        %v297 = vld [vmem:[#allocation5 + $0x28] sm:$0xff]
        %v298 = vld [vmem:[#allocation5 + $0x30] sm:$0xff]
        %v299 = vld [vmem:[#allocation5 + $0x38] sm:$0xff]
        %v300 = vld [vmem:[#allocation5 + $0x40] sm:$0xff]
        %v301 = vld [vmem:[#allocation5 + $0x48] sm:$0xff]
        %v302 = vld [vmem:[#allocation5 + $0x50] sm:$0xff]
        %v303 = vld [vmem:[#allocation5 + $0x58] sm:$0xff]
        %v304 = vld [vmem:[#allocation5 + $0x60] sm:$0xff]
        %v305 = vld [vmem:[#allocation5 + $0x68] sm:$0xff]
        %v306 = vld [vmem:[#allocation5 + $0x70] sm:$0xff]
        %v307 = vld [vmem:[#allocation5 + $0x78] sm:$0xff]
        %v308 = vld [vmem:[#allocation5 + $0x80] sm:$0xff]
        %v309 = vld [vmem:[#allocation5 + $0x88] sm:$0xff]
        %v310 = vld [vmem:[#allocation5 + $0x90] sm:$0xff]
        %v311 = vld [vmem:[#allocation5 + $0x98] sm:$0xff]
        %v312 = vld [vmem:[#allocation5 + $0xa0] sm:$0xff]
        %v313 = vld [vmem:[#allocation5 + $0xa8] sm:$0xff]
        %v314 = vld [vmem:[#allocation5 + $0xb0] sm:$0xff]
        %v315 = vld [vmem:[#allocation5 + $0xb8] sm:$0xff]
        %v316 = vld [vmem:[#allocation5 + $0xc0] sm:$0xff]
        %v317 = vld [vmem:[#allocation5 + $0xc8] sm:$0xff]
        %v318 = vld [vmem:[#allocation5 + $0xd0] sm:$0xff]
        %v319 = vld [vmem:[#allocation5 + $0xd8] sm:$0xff]
        %v320 = vld [vmem:[#allocation5 + $0xe0] sm:$0xff]
        %v321 = vld [vmem:[#allocation5 + $0xe8] sm:$0xff]
        %v322 = vld [vmem:[#allocation5 + $0xf0] sm:$0xff]
        %v323 = vld [vmem:[#allocation5 + $0xf8] sm:$0xff]
        %v324 = vld [vmem:[%s2] sm:$0x3]
        %v326 = vlaneseq
        %v327 = vshrl.u32 %v326, 7
        %v328 = vsub.s32 0, %v327
        %v329 = vrot.slane %v324, %v328
        %v330 = vlaneseq
        %v331 = vshrl.u32 %v330, 7
        %v332 = vsub.s32 1, %v331
        %v333 = vrot.slane %v324, %v332
        %v352 = vunpack.c.l.b16 %v276
        %v353 = vunpack.c.h.b16 %v276
        %v354 = vunpack.c.l.b16 %v277
        %v355 = vunpack.c.h.b16 %v277
        %v356 = vunpack.c.l.b16 %v278
        %v357 = vunpack.c.h.b16 %v278
        %v358 = vunpack.c.l.b16 %v279
        %v359 = vunpack.c.h.b16 %v279
        %v360 = vunpack.c.l.b16 %v280
        %v361 = vunpack.c.h.b16 %v280
        %v362 = vunpack.c.l.b16 %v281
        %v363 = vunpack.c.h.b16 %v281
        %v364 = vunpack.c.l.b16 %v282
        %v365 = vunpack.c.h.b16 %v282
        %v366 = vunpack.c.l.b16 %v283
        %v367 = vunpack.c.h.b16 %v283
        %v368 = vunpack.c.l.b16 %v284
        %v369 = vunpack.c.h.b16 %v284
        %v370 = vunpack.c.l.b16 %v285
        %v371 = vunpack.c.h.b16 %v285
        %v372 = vunpack.c.l.b16 %v286
        %v373 = vunpack.c.h.b16 %v286
        %v374 = vunpack.c.l.b16 %v287
        %v375 = vunpack.c.h.b16 %v287
        %v376 = vunpack.c.l.b16 %v288
        %v377 = vunpack.c.h.b16 %v288
        %v378 = vunpack.c.l.b16 %v289
        %v379 = vunpack.c.h.b16 %v289
        %v380 = vunpack.c.l.b16 %v290
        %v381 = vunpack.c.h.b16 %v290
        %v382 = vunpack.c.l.b16 %v291
        %v383 = vunpack.c.h.b16 %v291
        %v384 = vpack.c.b16 %v354, %v352
        %v385 = vpack.c.b16 %v355, %v353
        %v386 = vpack.c.b16 %v358, %v356
        %v387 = vpack.c.b16 %v359, %v357
        %v388 = vpack.c.b16 %v362, %v360
        %v389 = vpack.c.b16 %v363, %v361
        %v390 = vpack.c.b16 %v366, %v364
        %v391 = vpack.c.b16 %v367, %v365
        %v392 = vpack.c.b16 %v370, %v368
        %v393 = vpack.c.b16 %v371, %v369
        %v394 = vpack.c.b16 %v374, %v372
        %v395 = vpack.c.b16 %v375, %v373
        %v396 = vpack.c.b16 %v378, %v376
        %v397 = vpack.c.b16 %v379, %v377
        %v398 = vpack.c.b16 %v382, %v380
        %v399 = vpack.c.b16 %v383, %v381
        %v448 = vunpack.c.l.b16 %v292
        %v449 = vunpack.c.h.b16 %v292
        %v450 = vunpack.c.l.b16 %v293
        %v451 = vunpack.c.h.b16 %v293
        %v452 = vunpack.c.l.b16 %v294
        %v453 = vunpack.c.h.b16 %v294
        %v454 = vunpack.c.l.b16 %v295
        %v455 = vunpack.c.h.b16 %v295
        %v456 = vunpack.c.l.b16 %v296
        %v457 = vunpack.c.h.b16 %v296
        %v458 = vunpack.c.l.b16 %v297
        %v459 = vunpack.c.h.b16 %v297
        %v460 = vunpack.c.l.b16 %v298
        %v461 = vunpack.c.h.b16 %v298
        %v462 = vunpack.c.l.b16 %v299
        %v463 = vunpack.c.h.b16 %v299
        %v464 = vunpack.c.l.b16 %v300
        %v465 = vunpack.c.h.b16 %v300
        %v466 = vunpack.c.l.b16 %v301
        %v467 = vunpack.c.h.b16 %v301
        %v468 = vunpack.c.l.b16 %v302
        %v469 = vunpack.c.h.b16 %v302
        %v470 = vunpack.c.l.b16 %v303
        %v471 = vunpack.c.h.b16 %v303
        %v472 = vunpack.c.l.b16 %v304
        %v473 = vunpack.c.h.b16 %v304
        %v474 = vunpack.c.l.b16 %v305
        %v475 = vunpack.c.h.b16 %v305
        %v476 = vunpack.c.l.b16 %v306
        %v477 = vunpack.c.h.b16 %v306
        %v478 = vunpack.c.l.b16 %v307
        %v479 = vunpack.c.h.b16 %v307
        %v480 = vunpack.c.l.b16 %v308
        %v481 = vunpack.c.h.b16 %v308
        %v482 = vunpack.c.l.b16 %v309
        %v483 = vunpack.c.h.b16 %v309
        %v484 = vunpack.c.l.b16 %v310
        %v485 = vunpack.c.h.b16 %v310
        %v486 = vunpack.c.l.b16 %v311
        %v487 = vunpack.c.h.b16 %v311
        %v488 = vunpack.c.l.b16 %v312
        %v489 = vunpack.c.h.b16 %v312
        %v490 = vunpack.c.l.b16 %v313
        %v491 = vunpack.c.h.b16 %v313
        %v492 = vunpack.c.l.b16 %v314
        %v493 = vunpack.c.h.b16 %v314
        %v494 = vunpack.c.l.b16 %v315
        %v495 = vunpack.c.h.b16 %v315
        %v496 = vunpack.c.l.b16 %v316
        %v497 = vunpack.c.h.b16 %v316
        %v498 = vunpack.c.l.b16 %v317
        %v499 = vunpack.c.h.b16 %v317
        %v500 = vunpack.c.l.b16 %v318
        %v501 = vunpack.c.h.b16 %v318
        %v502 = vunpack.c.l.b16 %v319
        %v503 = vunpack.c.h.b16 %v319
        %v504 = vunpack.c.l.b16 %v320
        %v505 = vunpack.c.h.b16 %v320
        %v506 = vunpack.c.l.b16 %v321
        %v507 = vunpack.c.h.b16 %v321
        %v508 = vunpack.c.l.b16 %v322
        %v509 = vunpack.c.h.b16 %v322
        %v510 = vunpack.c.l.b16 %v323
        %v511 = vunpack.c.h.b16 %v323
        %v512 = vpack.c.b16 %v450, %v448
        %v513 = vpack.c.b16 %v451, %v449
        %v514 = vpack.c.b16 %v454, %v452
        %v515 = vpack.c.b16 %v455, %v453
        %v516 = vpack.c.b16 %v458, %v456
        %v517 = vpack.c.b16 %v459, %v457
        %v518 = vpack.c.b16 %v462, %v460
        %v519 = vpack.c.b16 %v463, %v461
        %v520 = vpack.c.b16 %v466, %v464
        %v521 = vpack.c.b16 %v467, %v465
        %v522 = vpack.c.b16 %v470, %v468
        %v523 = vpack.c.b16 %v471, %v469
        %v524 = vpack.c.b16 %v474, %v472
        %v525 = vpack.c.b16 %v475, %v473
        %v526 = vpack.c.b16 %v478, %v476
        %v527 = vpack.c.b16 %v479, %v477
        %v528 = vpack.c.b16 %v482, %v480
        %v529 = vpack.c.b16 %v483, %v481
        %v530 = vpack.c.b16 %v486, %v484
        %v531 = vpack.c.b16 %v487, %v485
        %v532 = vpack.c.b16 %v490, %v488
        %v533 = vpack.c.b16 %v491, %v489
        %v534 = vpack.c.b16 %v494, %v492
        %v535 = vpack.c.b16 %v495, %v493
        %v536 = vpack.c.b16 %v498, %v496
        %v537 = vpack.c.b16 %v499, %v497
        %v538 = vpack.c.b16 %v502, %v500
        %v539 = vpack.c.b16 %v503, %v501
        %v540 = vpack.c.b16 %v506, %v504
        %v541 = vpack.c.b16 %v507, %v505
        %v542 = vpack.c.b16 %v510, %v508
        %v543 = vpack.c.b16 %v511, %v509
        %576 = vmatprep.subr.bf16.mxu0 %v527
        %577 = vmatpush1.bf16.msra.mxu0 %v526
        %578 = vmatprep.subr.bf16.mxu0 %v525
        %579 = vmatpush1.bf16.msra.mxu0 %v524
        %580 = vmatprep.subr.bf16.mxu0 %v523
        %581 = vmatpush1.bf16.msra.mxu0 %v522
        %582 = vmatprep.subr.bf16.mxu0 %v521
        %583 = vmatpush1.bf16.msra.mxu0 %v520
        %584 = vmatprep.subr.bf16.mxu0 %v519
        %585 = vmatpush1.bf16.msra.mxu0 %v518
        %586 = vmatprep.subr.bf16.mxu0 %v517
        %587 = vmatpush1.bf16.msra.mxu0 %v516
        %588 = vmatprep.subr.bf16.mxu0 %v515
        %589 = vmatpush1.bf16.msra.mxu0 %v514
        %590 = vmatprep.subr.bf16.mxu0 %v513
        %591 = vmatpush1.bf16.msra.mxu0 %v512
        %592 = vmatprep.subr.bf16.mxu0 %v543
        %593 = vmatpush2.bf16.msra.mxu0 %v542
        %594 = vmatprep.subr.bf16.mxu0 %v541
        %595 = vmatpush2.bf16.msra.mxu0 %v540
        %596 = vmatprep.subr.bf16.mxu0 %v539
        %597 = vmatpush2.bf16.msra.mxu0 %v538
        %598 = vmatprep.subr.bf16.mxu0 %v537
        %599 = vmatpush2.bf16.msra.mxu0 %v536
        %600 = vmatprep.subr.bf16.mxu0 %v535
        %601 = vmatpush2.bf16.msra.mxu0 %v534
        %602 = vmatprep.subr.bf16.mxu0 %v533
        %603 = vmatpush2.bf16.msra.mxu0 %v532
        %604 = vmatprep.subr.bf16.mxu0 %v531
        %605 = vmatpush2.bf16.msra.mxu0 %v530
        %606 = vmatprep.subr.bf16.mxu0 %v529
        %607 = vmatpush2.bf16.msra.mxu0 %v528
        %608 = vmatprep.mubr.bf16.mxu0 %v385
        %609 = vmatmul.mubr.bf16.gmra.mxu0 %v384
        %v610 = vpop.f32.mrf.mxu0
        %v611 = vadd.f32 %v329, %v610
        %v612 = vpop.f32.mrf.mxu0
        %v613 = vadd.f32 %v333, %v612
        %v614 = vpop.f32.mrf.mxu0
        %v615 = vadd.f32 %v329, %v614
        %v616 = vpop.f32.mrf.mxu0
        %v617 = vadd.f32 %v333, %v616
        %618 = vmatprep.mubr.bf16.mxu0 %v387
        %619 = vmatmul.mubr.bf16.gmra.mxu0 %v386
        %v620 = vpop.f32.mrf.mxu0
        %v621 = vadd.f32 %v329, %v620
        %v622 = vpop.f32.mrf.mxu0
        %v623 = vadd.f32 %v333, %v622
        %v624 = vpop.f32.mrf.mxu0
        %v625 = vadd.f32 %v329, %v624
        %v626 = vpop.f32.mrf.mxu0
        %v627 = vadd.f32 %v333, %v626
        %628 = vmatprep.mubr.bf16.mxu0 %v389
        %629 = vmatmul.mubr.bf16.gmra.mxu0 %v388
        %v630 = vpop.f32.mrf.mxu0
        %v631 = vadd.f32 %v329, %v630
        %v632 = vpop.f32.mrf.mxu0
        %v633 = vadd.f32 %v333, %v632
        %v634 = vpop.f32.mrf.mxu0
        %v635 = vadd.f32 %v329, %v634
        %v636 = vpop.f32.mrf.mxu0
        %v637 = vadd.f32 %v333, %v636
        %638 = vmatprep.mubr.bf16.mxu0 %v391
        %639 = vmatmul.mubr.bf16.gmra.mxu0 %v390
        %v640 = vpop.f32.mrf.mxu0
        %v641 = vadd.f32 %v329, %v640
        %v642 = vpop.f32.mrf.mxu0
        %v643 = vadd.f32 %v333, %v642
        %v644 = vpop.f32.mrf.mxu0
        %v645 = vadd.f32 %v329, %v644
        %v646 = vpop.f32.mrf.mxu0
        %v647 = vadd.f32 %v333, %v646
        %648 = vmatprep.mubr.bf16.mxu0 %v393
        %649 = vmatmul.mubr.bf16.gmra.mxu0 %v392
        %v650 = vpop.f32.mrf.mxu0
        %v651 = vadd.f32 %v329, %v650
        %v652 = vpop.f32.mrf.mxu0
        %v653 = vadd.f32 %v333, %v652
        %v654 = vpop.f32.mrf.mxu0
        %v655 = vadd.f32 %v329, %v654
        %v656 = vpop.f32.mrf.mxu0
        %v657 = vadd.f32 %v333, %v656
        %658 = vmatprep.mubr.bf16.mxu0 %v395
        %659 = vmatmul.mubr.bf16.gmra.mxu0 %v394
        %v660 = vpop.f32.mrf.mxu0
        %v661 = vadd.f32 %v329, %v660
        %v662 = vpop.f32.mrf.mxu0
        %v663 = vadd.f32 %v333, %v662
        %v664 = vpop.f32.mrf.mxu0
        %v665 = vadd.f32 %v329, %v664
        %v666 = vpop.f32.mrf.mxu0
        %v667 = vadd.f32 %v333, %v666
        %668 = vmatprep.mubr.bf16.mxu0 %v397
        %669 = vmatmul.mubr.bf16.gmra.mxu0 %v396
        %v670 = vpop.f32.mrf.mxu0
        %v671 = vadd.f32 %v329, %v670
        %v672 = vpop.f32.mrf.mxu0
        %v673 = vadd.f32 %v333, %v672
        %v674 = vpop.f32.mrf.mxu0
        %v675 = vadd.f32 %v329, %v674
        %v676 = vpop.f32.mrf.mxu0
        %v677 = vadd.f32 %v333, %v676
        %678 = vmatprep.mubr.bf16.mxu0 %v399
        %679 = vmatmul.mubr.bf16.gmra.mxu0 %v398
        %v680 = vpop.f32.mrf.mxu0
        %v681 = vadd.f32 %v329, %v680
        %v682 = vpop.f32.mrf.mxu0
        %v683 = vadd.f32 %v333, %v682
        %v684 = vpop.f32.mrf.mxu0
        %v685 = vadd.f32 %v329, %v684
        %v686 = vpop.f32.mrf.mxu0
        %v687 = vadd.f32 %v333, %v686
        %688 = vdwg.mxu0
        %vm689 = vcmp.ge.f32.partialorder %v611, 0.0
        %vm690 = vcmp.ge.f32.partialorder %v613, 0.0
        %vm691 = vcmp.ge.f32.partialorder %v615, 0.0
        %vm692 = vcmp.ge.f32.partialorder %v617, 0.0
        %vm693 = vcmp.ge.f32.partialorder %v621, 0.0
        %vm694 = vcmp.ge.f32.partialorder %v623, 0.0
        %vm695 = vcmp.ge.f32.partialorder %v625, 0.0
        %vm696 = vcmp.ge.f32.partialorder %v627, 0.0
        %vm697 = vcmp.ge.f32.partialorder %v631, 0.0
        %vm698 = vcmp.ge.f32.partialorder %v633, 0.0
        %vm699 = vcmp.ge.f32.partialorder %v635, 0.0
        %vm700 = vcmp.ge.f32.partialorder %v637, 0.0
        %vm701 = vcmp.ge.f32.partialorder %v641, 0.0
        %vm702 = vcmp.ge.f32.partialorder %v643, 0.0
        %vm703 = vcmp.ge.f32.partialorder %v645, 0.0
        %vm704 = vcmp.ge.f32.partialorder %v647, 0.0
        %vm705 = vcmp.ge.f32.partialorder %v651, 0.0
        %vm706 = vcmp.ge.f32.partialorder %v653, 0.0
        %vm707 = vcmp.ge.f32.partialorder %v655, 0.0
        %vm708 = vcmp.ge.f32.partialorder %v657, 0.0
        %vm709 = vcmp.ge.f32.partialorder %v661, 0.0
        %vm710 = vcmp.ge.f32.partialorder %v663, 0.0
        %vm711 = vcmp.ge.f32.partialorder %v665, 0.0
        %vm712 = vcmp.ge.f32.partialorder %v667, 0.0
        %vm713 = vcmp.ge.f32.partialorder %v671, 0.0
        %vm714 = vcmp.ge.f32.partialorder %v673, 0.0
        %vm715 = vcmp.ge.f32.partialorder %v675, 0.0
        %vm716 = vcmp.ge.f32.partialorder %v677, 0.0
        %vm717 = vcmp.ge.f32.partialorder %v681, 0.0
        %vm718 = vcmp.ge.f32.partialorder %v683, 0.0
        %vm719 = vcmp.ge.f32.partialorder %v685, 0.0
        %vm720 = vcmp.ge.f32.partialorder %v687, 0.0
        %v721 = vmul.f32 %v611, 0.2
        %v722 = vmul.f32 %v613, 0.2
        %v723 = vmul.f32 %v615, 0.2
        %v724 = vmul.f32 %v617, 0.2
        %v725 = vmul.f32 %v621, 0.2
        %v726 = vmul.f32 %v623, 0.2
        %v727 = vmul.f32 %v625, 0.2
        %v728 = vmul.f32 %v627, 0.2
        %v729 = vmul.f32 %v631, 0.2
        %v730 = vmul.f32 %v633, 0.2
        %v731 = vmul.f32 %v635, 0.2
        %v732 = vmul.f32 %v637, 0.2
        %v733 = vmul.f32 %v641, 0.2
        %v734 = vmul.f32 %v643, 0.2
        %v735 = vmul.f32 %v645, 0.2
        %v736 = vmul.f32 %v647, 0.2
        %v737 = vmul.f32 %v651, 0.2
        %v738 = vmul.f32 %v653, 0.2
        %v739 = vmul.f32 %v655, 0.2
        %v740 = vmul.f32 %v657, 0.2
        %v741 = vmul.f32 %v661, 0.2
        %v742 = vmul.f32 %v663, 0.2
        %v743 = vmul.f32 %v665, 0.2
        %v744 = vmul.f32 %v667, 0.2
        %v745 = vmul.f32 %v671, 0.2
        %v746 = vmul.f32 %v673, 0.2
        %v747 = vmul.f32 %v675, 0.2
        %v748 = vmul.f32 %v677, 0.2
        %v749 = vmul.f32 %v681, 0.2
        %v750 = vmul.f32 %v683, 0.2
        %v751 = vmul.f32 %v685, 0.2
        %v752 = vmul.f32 %v687, 0.2
        %v753 = vsel %vm689, %v611, %v721
        %v754 = vsel %vm690, %v613, %v722
        %v755 = vsel %vm691, %v615, %v723
        %v756 = vsel %vm692, %v617, %v724
        %v757 = vsel %vm693, %v621, %v725
        %v758 = vsel %vm694, %v623, %v726
        %v759 = vsel %vm695, %v625, %v727
        %v760 = vsel %vm696, %v627, %v728
        %v761 = vsel %vm697, %v631, %v729
        %v762 = vsel %vm698, %v633, %v730
        %v763 = vsel %vm699, %v635, %v731
        %v764 = vsel %vm700, %v637, %v732
        %v765 = vsel %vm701, %v641, %v733
        %v766 = vsel %vm702, %v643, %v734
        %v767 = vsel %vm703, %v645, %v735
        %v768 = vsel %vm704, %v647, %v736
        %v769 = vsel %vm705, %v651, %v737
        %v770 = vsel %vm706, %v653, %v738
        %v771 = vsel %vm707, %v655, %v739
        %v772 = vsel %vm708, %v657, %v740
        %v773 = vsel %vm709, %v661, %v741
        %v774 = vsel %vm710, %v663, %v742
        %v775 = vsel %vm711, %v665, %v743
        %v776 = vsel %vm712, %v667, %v744
        %v777 = vsel %vm713, %v671, %v745
        %v778 = vsel %vm714, %v673, %v746
        %v779 = vsel %vm715, %v675, %v747
        %v780 = vsel %vm716, %v677, %v748
        %v781 = vsel %vm717, %v681, %v749
        %v782 = vsel %vm718, %v683, %v750
        %v783 = vsel %vm719, %v685, %v751
        %v784 = vsel %vm720, %v687, %v752
        %v785 = vpack.c.bf16 %v755, %v753
        %v786 = vpack.c.bf16 %v756, %v754
        %v787 = vpack.c.bf16 %v759, %v757
        %v788 = vpack.c.bf16 %v760, %v758
        %v789 = vpack.c.bf16 %v763, %v761
        %v790 = vpack.c.bf16 %v764, %v762
        %v791 = vpack.c.bf16 %v767, %v765
        %v792 = vpack.c.bf16 %v768, %v766
        %v793 = vpack.c.bf16 %v771, %v769
        %v794 = vpack.c.bf16 %v772, %v770
        %v795 = vpack.c.bf16 %v775, %v773
        %v796 = vpack.c.bf16 %v776, %v774
        %v797 = vpack.c.bf16 %v779, %v777
        %v798 = vpack.c.bf16 %v780, %v778
        %v799 = vpack.c.bf16 %v783, %v781
        %v800 = vpack.c.bf16 %v784, %v782
        %v801 = vld [vmem:[#allocation7] sm:$0xf]
        %v802 = vld [vmem:[#allocation7 + $0x4] sm:$0xf]
        %v803 = vld [vmem:[#allocation7 + $0x8] sm:$0xf]
        %v804 = vld [vmem:[#allocation7 + $0xc] sm:$0xf]
        %v805 = vld [vmem:[#allocation7 + $0x10] sm:$0xf]
        %v806 = vld [vmem:[#allocation7 + $0x14] sm:$0xf]
        %v807 = vld [vmem:[#allocation7 + $0x18] sm:$0xf]
        %v808 = vld [vmem:[#allocation7 + $0x1c] sm:$0xf]
        %v809 = vld [vmem:[#allocation7 + $0x20] sm:$0xf]
        %v810 = vld [vmem:[#allocation7 + $0x24] sm:$0xf]
        %v811 = vld [vmem:[#allocation7 + $0x28] sm:$0xf]
        %v812 = vld [vmem:[#allocation7 + $0x2c] sm:$0xf]
        %v813 = vld [vmem:[#allocation7 + $0x30] sm:$0xf]
        %v814 = vld [vmem:[#allocation7 + $0x34] sm:$0xf]
        %v815 = vld [vmem:[#allocation7 + $0x38] sm:$0xf]
        %v816 = vld [vmem:[#allocation7 + $0x3c] sm:$0xf]
        %v817 = vld [vmem:[#allocation7 + $0x40] sm:$0xf]
        %v818 = vld [vmem:[#allocation7 + $0x44] sm:$0xf]
        %v819 = vld [vmem:[#allocation7 + $0x48] sm:$0xf]
        %v820 = vld [vmem:[#allocation7 + $0x4c] sm:$0xf]
        %v821 = vld [vmem:[#allocation7 + $0x50] sm:$0xf]
        %v822 = vld [vmem:[#allocation7 + $0x54] sm:$0xf]
        %v823 = vld [vmem:[#allocation7 + $0x58] sm:$0xf]
        %v824 = vld [vmem:[#allocation7 + $0x5c] sm:$0xf]
        %v825 = vld [vmem:[#allocation7 + $0x60] sm:$0xf]
        %v826 = vld [vmem:[#allocation7 + $0x64] sm:$0xf]
        %v827 = vld [vmem:[#allocation7 + $0x68] sm:$0xf]
        %v828 = vld [vmem:[#allocation7 + $0x6c] sm:$0xf]
        %v829 = vld [vmem:[#allocation7 + $0x70] sm:$0xf]
        %v830 = vld [vmem:[#allocation7 + $0x74] sm:$0xf]
        %v831 = vld [vmem:[#allocation7 + $0x78] sm:$0xf]
        %v832 = vld [vmem:[#allocation7 + $0x7c] sm:$0xf]
        %v833 = vld [vmem:[%s4] sm:$0x1]
        %v835 = vlaneseq
        %v836 = vshrl.u32 %v835, 7
        %v837 = vsub.s32 0, %v836
        %v838 = vrot.slane %v833, %v837
        %v872 = vunpack.c.l.b16 %v801
        %v873 = vunpack.c.l.b16 %v802
        %v874 = vunpack.c.l.b16 %v803
        %v875 = vunpack.c.l.b16 %v804
        %v876 = vunpack.c.l.b16 %v805
        %v877 = vunpack.c.l.b16 %v806
        %v878 = vunpack.c.l.b16 %v807
        %v879 = vunpack.c.l.b16 %v808
        %v880 = vunpack.c.l.b16 %v809
        %v881 = vunpack.c.l.b16 %v810
        %v882 = vunpack.c.l.b16 %v811
        %v883 = vunpack.c.l.b16 %v812
        %v884 = vunpack.c.l.b16 %v813
        %v885 = vunpack.c.l.b16 %v814
        %v886 = vunpack.c.l.b16 %v815
        %v887 = vunpack.c.l.b16 %v816
        %v888 = vunpack.c.l.b16 %v817
        %v889 = vunpack.c.l.b16 %v818
        %v890 = vunpack.c.l.b16 %v819
        %v891 = vunpack.c.l.b16 %v820
        %v892 = vunpack.c.l.b16 %v821
        %v893 = vunpack.c.l.b16 %v822
        %v894 = vunpack.c.l.b16 %v823
        %v895 = vunpack.c.l.b16 %v824
        %v896 = vunpack.c.l.b16 %v825
        %v897 = vunpack.c.l.b16 %v826
        %v898 = vunpack.c.l.b16 %v827
        %v899 = vunpack.c.l.b16 %v828
        %v900 = vunpack.c.l.b16 %v829
        %v901 = vunpack.c.l.b16 %v830
        %v902 = vunpack.c.l.b16 %v831
        %v903 = vunpack.c.l.b16 %v832
        %v904 = vpack.c.b16 %v873, %v872
        %v905 = vpack.c.b16 %v875, %v874
        %v906 = vpack.c.b16 %v877, %v876
        %v907 = vpack.c.b16 %v879, %v878
        %v908 = vpack.c.b16 %v881, %v880
        %v909 = vpack.c.b16 %v883, %v882
        %v910 = vpack.c.b16 %v885, %v884
        %v911 = vpack.c.b16 %v887, %v886
        %v912 = vpack.c.b16 %v889, %v888
        %v913 = vpack.c.b16 %v891, %v890
        %v914 = vpack.c.b16 %v893, %v892
        %v915 = vpack.c.b16 %v895, %v894
        %v916 = vpack.c.b16 %v897, %v896
        %v917 = vpack.c.b16 %v899, %v898
        %v918 = vpack.c.b16 %v901, %v900
        %v919 = vpack.c.b16 %v903, %v902
        %936 = vmatprep.subr.bf16.mxu0 0
        %937 = vmatpush1.bf16.msra.mxu0 %v911
        %938 = vmatprep.subr.bf16.mxu0 0
        %939 = vmatpush1.bf16.msra.mxu0 %v910
        %940 = vmatprep.subr.bf16.mxu0 0
        %941 = vmatpush1.bf16.msra.mxu0 %v909
        %942 = vmatprep.subr.bf16.mxu0 0
        %943 = vmatpush1.bf16.msra.mxu0 %v908
        %944 = vmatprep.subr.bf16.mxu0 0
        %945 = vmatpush1.bf16.msra.mxu0 %v907
        %946 = vmatprep.subr.bf16.mxu0 0
        %947 = vmatpush1.bf16.msra.mxu0 %v906
        %948 = vmatprep.subr.bf16.mxu0 0
        %949 = vmatpush1.bf16.msra.mxu0 %v905
        %950 = vmatprep.subr.bf16.mxu0 0
        %951 = vmatpush1.bf16.msra.mxu0 %v904
        %952 = vmatprep.subr.bf16.mxu0 0
        %953 = vmatpush2.bf16.msra.mxu0 %v919
        %954 = vmatprep.subr.bf16.mxu0 0
        %955 = vmatpush2.bf16.msra.mxu0 %v918
        %956 = vmatprep.subr.bf16.mxu0 0
        %957 = vmatpush2.bf16.msra.mxu0 %v917
        %958 = vmatprep.subr.bf16.mxu0 0
        %959 = vmatpush2.bf16.msra.mxu0 %v916
        %960 = vmatprep.subr.bf16.mxu0 0
        %961 = vmatpush2.bf16.msra.mxu0 %v915
        %962 = vmatprep.subr.bf16.mxu0 0
        %963 = vmatpush2.bf16.msra.mxu0 %v914
        %964 = vmatprep.subr.bf16.mxu0 0
        %965 = vmatpush2.bf16.msra.mxu0 %v913
        %966 = vmatprep.subr.bf16.mxu0 0
        %967 = vmatpush2.bf16.msra.mxu0 %v912
        %968 = vmatprep.mubr.bf16.mxu0 %v786
        %969 = vmatmul.mubr.bf16.gmra.mxu0 %v785
        %v970 = vpop.f32.mrf.mxu0
        %v971 = vadd.f32 %v838, %v970
        %v972 = vpop.f32.mrf.mxu0
        %v973 = vpop.f32.mrf.mxu0
        %v974 = vadd.f32 %v838, %v973
        %v975 = vpop.f32.mrf.mxu0
        %976 = vmatprep.mubr.bf16.mxu0 %v788
        %977 = vmatmul.mubr.bf16.gmra.mxu0 %v787
        %v978 = vpop.f32.mrf.mxu0
        %v979 = vadd.f32 %v838, %v978
        %v980 = vpop.f32.mrf.mxu0
        %v981 = vpop.f32.mrf.mxu0
        %v982 = vadd.f32 %v838, %v981
        %v983 = vpop.f32.mrf.mxu0
        %984 = vmatprep.mubr.bf16.mxu0 %v790
        %985 = vmatmul.mubr.bf16.gmra.mxu0 %v789
        %v986 = vpop.f32.mrf.mxu0
        %v987 = vadd.f32 %v838, %v986
        %v988 = vpop.f32.mrf.mxu0
        %v989 = vpop.f32.mrf.mxu0
        %v990 = vadd.f32 %v838, %v989
        %v991 = vpop.f32.mrf.mxu0
        %992 = vmatprep.mubr.bf16.mxu0 %v792
        %993 = vmatmul.mubr.bf16.gmra.mxu0 %v791
        %v994 = vpop.f32.mrf.mxu0
        %v995 = vadd.f32 %v838, %v994
        %v996 = vpop.f32.mrf.mxu0
        %v997 = vpop.f32.mrf.mxu0
        %v998 = vadd.f32 %v838, %v997
        %v999 = vpop.f32.mrf.mxu0
        %1000 = vmatprep.mubr.bf16.mxu0 %v794
        %1001 = vmatmul.mubr.bf16.gmra.mxu0 %v793
        %v1002 = vpop.f32.mrf.mxu0
        %v1003 = vadd.f32 %v838, %v1002
        %v1004 = vpop.f32.mrf.mxu0
        %v1005 = vpop.f32.mrf.mxu0
        %v1006 = vadd.f32 %v838, %v1005
        %v1007 = vpop.f32.mrf.mxu0
        %1008 = vmatprep.mubr.bf16.mxu0 %v796
        %1009 = vmatmul.mubr.bf16.gmra.mxu0 %v795
        %v1010 = vpop.f32.mrf.mxu0
        %v1011 = vadd.f32 %v838, %v1010
        %v1012 = vpop.f32.mrf.mxu0
        %v1013 = vpop.f32.mrf.mxu0
        %v1014 = vadd.f32 %v838, %v1013
        %v1015 = vpop.f32.mrf.mxu0
        %1016 = vmatprep.mubr.bf16.mxu0 %v798
        %1017 = vmatmul.mubr.bf16.gmra.mxu0 %v797
        %v1018 = vpop.f32.mrf.mxu0
        %v1019 = vadd.f32 %v838, %v1018
        %v1020 = vpop.f32.mrf.mxu0
        %v1021 = vpop.f32.mrf.mxu0
        %v1022 = vadd.f32 %v838, %v1021
        %v1023 = vpop.f32.mrf.mxu0
        %1024 = vmatprep.mubr.bf16.mxu0 %v800
        %1025 = vmatmul.mubr.bf16.gmra.mxu0 %v799
        %v1026 = vpop.f32.mrf.mxu0
        %v1027 = vadd.f32 %v838, %v1026
        %v1028 = vpop.f32.mrf.mxu0
        %v1029 = vpop.f32.mrf.mxu0
        %v1030 = vadd.f32 %v838, %v1029
        %v1031 = vpop.f32.mrf.mxu0
        %1032 = vdwg.mxu0
        %1033 = vst [vmem:[%s272] sm:$0xff] %v971
        %1034 = vst [vmem:[%s272 + $0x8] sm:$0xff] %v974
        %1035 = vst [vmem:[%s272 + $0x10] sm:$0xff] %v979
        %1036 = vst [vmem:[%s272 + $0x18] sm:$0xff] %v982
        %1037 = vst [vmem:[%s272 + $0x20] sm:$0xff] %v987
        %1038 = vst [vmem:[%s272 + $0x28] sm:$0xff] %v990
        %1039 = vst [vmem:[%s272 + $0x30] sm:$0xff] %v995
        %1040 = vst [vmem:[%s272 + $0x38] sm:$0xff] %v998
        %1041 = vst [vmem:[%s272 + $0x40] sm:$0xff] %v1003
        %1042 = vst [vmem:[%s272 + $0x48] sm:$0xff] %v1006
        %1043 = vst [vmem:[%s272 + $0x50] sm:$0xff] %v1011
        %1044 = vst [vmem:[%s272 + $0x58] sm:$0xff] %v1014
        %1045 = vst [vmem:[%s272 + $0x60] sm:$0xff] %v1019
        %1046 = vst [vmem:[%s272 + $0x68] sm:$0xff] %v1022
        %1047 = vst [vmem:[%s272 + $0x70] sm:$0xff] %v1027
        %1048 = vst [vmem:[%s272 + $0x78] sm:$0xff] %v1030
        %s1049 = sand.u32 %s141, 1
        %s1050 = scalar_lea.sflag [#allocation4], %s1049
        %s1051 = sand.u32 %s141, 1
        %s1052 = smul.addr %s1051, 128
        %s1053 = scalar_lea.vmem [#allocation8], %s1052
        // Predicated region
        $region53: #{tpu_custom_call.1} parent=39 // pred_check
          %p1054 = pneg %p151
        $region54: #{tpu_custom_call.1} parent=39 // pred_check_branch
          %1056 = sbr.rel (%p1054) target = $region56
        $region55: #{tpu_custom_call.1} parent=39 // pred_region
          %s1057 = smul.u32 16, %s23
          %s1059 = ssub.s32 2048, 2048
          %1060 = vsyncadd %s1050, %s1059
          %s1061 = smul.addr %s1057, 128
          %s1062 = scalar_lea.hbm %s5, %s1061
          %s1063 = sshll.u32 %s1053, 4
          %s1064 = int_to_ptr.vmem [resolvable:$true] %s1063
          %1069 = dma.vmem_to_hbm [thread:$0]  %s1064, 2048, %s1062, %s1050, 128, 128, 8
        $region56: #{tpu_custom_call.1} parent=39 // pred_fallthru
          _
      $region40: #{tpu_custom_call.1} parent=5 // pred_fallthru
        _
      %p1070 = scmp.le.s32.totalorder 2, %s18
      // Predicated region
      $region57: #{tpu_custom_call.1} parent=5 // pred_check
        %p1071 = pneg %p1070
      $region58: #{tpu_custom_call.1} parent=5 // pred_check_branch
        %1073 = sbr.rel (%p1071) target = $region60
      $region59: #{tpu_custom_call.1} parent=5 // pred_region
        %s1074 = ssub.s32 %s18, 2
        // Predicated region
        $region61: #{tpu_custom_call.1} parent=59 // pred_check
          %p1075 = pneg %p157
        $region62: #{tpu_custom_call.1} parent=59 // pred_check_branch
          %1077 = sbr.rel (%p1075) target = $region64
        $region63: #{tpu_custom_call.1} parent=59 // pred_region
          %s1078 = sand.u32 %s142, 1
          %s1079 = scalar_lea.sflag [#allocation4], %s1078
          %s1080 = sand.u32 %s142, 1
          %s1081 = smul.addr %s1080, 128
          %s1082 = scalar_lea.vmem [#allocation8], %s1081
          %1083 = dma.done %s1079, 2048
        $region64: #{tpu_custom_call.1} parent=59 // pred_fallthru
          _
      $region60: #{tpu_custom_call.1} parent=5 // pred_fallthru
        _
    $region6: #{tpu_custom_call.1} parent=1 // loop_footer
      %s22 = sadd.s32 1, %s18
    $region7: #{tpu_custom_call.1} parent=1 // loop_footer_branch
      %17 = sbr.rel target = $region3
    $region8: #{tpu_custom_call.1} parent=1 // loop_exit
      _
    %1084 = vsyncpa [#allocation3], 1
    %s1085 = scalar_lea.sflag [#allocation3], 1
    %1086 = vsyncpa %s1085, 1
    %1087 = vsyncpa [#allocation6], 1
    %1088 = vsyncpa [#allocation4], 1
    %s1089 = scalar_lea.sflag [#allocation4], 1
    %1090 = vsyncpa %s1089, 1

</llo_original>
